<compile_context>
chip_gen: v5e
topology: v5e:2x2
jax: 0.10.0
libtpu: 0.0.40
codegen_flags: <defaults>
</compile_context>

<pallas_src>
import jax
import jax.numpy as jnp
from jax.experimental import pallas as pl
from jax.experimental.pallas import tpu as pltpu

_LANE = 128


def _policy_kernel(x_ref, p_ref, o_ref):
    hi = jax.lax.Precision.HIGHEST

    x = x_ref[...]                                   # (3, TM)   batch on lanes

    # Static slices of the packed (16, 128) parameter slab.
    w1 = p_ref[0:10, 0:3]                            # (10, 3)
    b1 = p_ref[0:10, 3:4]                            # (10, 1)
    w2 = p_ref[0:10, 4:14]                           # (10, 10)
    b2 = p_ref[0:10, 14:15]                          # (10, 1)
    w3 = p_ref[10:11, 0:10]                          # (1, 10)
    b3 = p_ref[10:11, 10:11]                         # (1, 1)

    # fc1 on the MXU (it has huge slack); bias/relu on the VPU.
    h1 = jnp.dot(w1, x, preferred_element_type=jnp.float32, precision=hi) + b1
    h1 = jnp.maximum(h1, 0.0)                        # (10, TM)

    # fc2 on the MXU.
    h2 = jnp.dot(w2, h1, preferred_element_type=jnp.float32, precision=hi) + b2
    h2 = jnp.maximum(h2, 0.0)                        # (10, TM)

    # fc3 on the MXU (replaces the old XLU sublane reduce).
    h3 = jnp.dot(w3, h2, preferred_element_type=jnp.float32, precision=hi) + b3

    o_ref[...] = jnp.tanh(h3) * 2.0                  # (1, TM) lane-dense store


def _pack_params(p):
    """Pack all weights/biases into one (16, 128) f32 slab (single resident DMA)."""
    P = jnp.zeros((16, _LANE), jnp.float32)
    P = P.at[0:10, 0:3].set(p["w1"])                 # fc1 weight (10, 3)
    P = P.at[0:10, 3].set(p["b1"])                   # fc1 bias   (10,)
    P = P.at[0:10, 4:14].set(p["w2"])                # fc2 weight (10, 10)
    P = P.at[0:10, 14].set(p["b2"])                  # fc2 bias   (10,)
    P = P.at[10, 0:10].set(p["w3"][0])               # fc3 weight (1, 10) as a row
    P = P.at[10, 10].set(p["b3"][0])                 # fc3 bias   (1,)
    return P


def gaussian_policy_forward(x, params, *, block_b=128 * 1024):
    """x: (B, 3) float32 -> (B, 1).  params: torch-layout w (out, in), b (out,)."""
    B = x.shape[0]

    # ---- batch tile: big enough to amortize per-step overhead, multiple of 128,
    #      but capped at ceil(Bp/4) so v7x's two TensorCores both get tiles. ----
    bp128 = pl.cdiv(B, _LANE) * _LANE
    tm_cap = max(_LANE, (int(block_b) // _LANE) * _LANE)
    tm_quarter = max(_LANE, pl.cdiv(pl.cdiv(bp128, 4), _LANE) * _LANE)
    tm = min(tm_cap, tm_quarter)
    bp = pl.cdiv(B, tm) * tm

    # ---- batch-on-lane layout; pad only when actually needed -------------------
    # TODO(synk): have the producer emit x feature-major (3, B) so this transpose
    # pass (which re-reads/writes all of x once) disappears entirely.
    xt = x.T
    if bp != B:
        xt = jnp.pad(xt, ((0, 0), (0, bp - B)))

    packed = _pack_params(params)

    # Double-buffered (3,tm) input + (1,tm) output blocks sublane-pad to 8 rows
    # each -> ~128*tm bytes; request that explicitly (v5e scoped default is 16 MiB).
    vmem_limit = int(max(16 << 20, 128 * tm + (2 << 20)))

    out_t = pl.pallas_call(
        _policy_kernel,
        out_shape=jax.ShapeDtypeStruct((1, bp), jnp.float32),
        grid=(bp // tm,),
        in_specs=[
            pl.BlockSpec((3, tm), lambda i: (0, i)),       # stream batch tiles of x
            pl.BlockSpec((16, _LANE), lambda i: (0, 0)),   # packed params, VMEM-resident
        ],
        out_specs=pl.BlockSpec((1, tm), lambda i: (0, i)),
        compiler_params=pltpu.CompilerParams(
            dimension_semantics=("parallel",),             # megacore shard on v7x
            vmem_limit_bytes=vmem_limit,
        ),
    )(xt, packed)

    out = out_t if bp == B else out_t[:, :B]
    return out.T                                           # (B, 1)


def init_params(key):
    """nn.Linear-style U(-1/sqrt(fan_in), 1/sqrt(fan_in)); weights stored (out, in)."""
    def linear(k, fan_in, fan_out):
        kw, kb = jax.random.split(k)
        bound = fan_in ** -0.5
        w = jax.random.uniform(kw, (fan_out, fan_in), jnp.float32, -bound, bound)
        b = jax.random.uniform(kb, (fan_out,), jnp.float32, -bound, bound)
        return w, b

    k1, k2, k3 = jax.random.split(key, 3)
    w1, b1 = linear(k1, 3, 10)
    w2, b2 = linear(k2, 10, 10)
    w3, b3 = linear(k3, 10, 1)
    return {"w1": w1, "b1": b1, "w2": w2, "b2": b2, "w3": w3, "b3": b3}


def _reference(x, p):
    hi = jax.lax.Precision.HIGHEST
    h1 = jnp.maximum(jnp.dot(x, p["w1"].T, precision=hi) + p["b1"], 0.0)
    h2 = jnp.maximum(jnp.dot(h1, p["w2"].T, precision=hi) + p["b2"], 0.0)
    return jnp.tanh(jnp.dot(h2, p["w3"].T, precision=hi) + p["b3"]) * 2.0


if __name__ == "__main__":
    key = jax.random.PRNGKey(0)
    kx, kp = jax.random.split(key)

    B = 200                       # small; exercises batch padding + a 2-step grid
    x = jax.random.normal(kx, (B, 3), jnp.float32)
    params = init_params(kp)

    out = gaussian_policy_forward(x, params)
    out = jax.block_until_ready(out)

    ref = _reference(x, params)
    assert out.shape == (B, 1), out.shape
    assert jnp.allclose(out, ref, atol=1e-5, rtol=1e-5), float(
        jnp.max(jnp.abs(out - ref)))

    print("KERNEL_OK")
</pallas_src>

<mosaic_0001>
module attributes {stable_mosaic.version = 11 : i64} {
  func.func @_policy_kernel(%arg0: i32, %arg1: memref<3x128xf32, #tpu.memory_space<vmem>>, %arg2: memref<16x128xf32, #tpu.memory_space<vmem>>, %arg3: memref<1x128xf32, #tpu.memory_space<vmem>>) attributes {dimension_semantics = [#tpu.dimension_semantics<parallel>], iteration_bounds = array<i64: 2>, scalar_prefetch = 0 : i64, scratch_operands = 0 : i64, tpu.core_type = #tpu.core_type<tc>, window_params = [{transform_indices = @transform_0, window_bounds = array<i64: 3, 128>}, {pipeline_mode = #tpu.pipeline_mode<synchronous>, transform_indices = @transform_1, window_bounds = array<i64: 16, 128>}, {transform_indices = @transform_2, window_bounds = array<i64: 1, 128>}]} {
    %c0 = arith.constant 0 : index
    %c0_0 = arith.constant 0 : index
    %0 = vector.load %arg1[%c0, %c0_0] : memref<3x128xf32, #tpu.memory_space<vmem>>, vector<3x128xf32>
    %c0_1 = arith.constant 0 : index
    %c0_2 = arith.constant 0 : index
    %1 = vector.load %arg2[%c0_1, %c0_2] : memref<16x128xf32, #tpu.memory_space<vmem>>, vector<10x3xf32>
    %c0_3 = arith.constant 0 : index
    %c3 = arith.constant 3 : index
    %2 = vector.load %arg2[%c0_3, %c3] : memref<16x128xf32, #tpu.memory_space<vmem>>, vector<10x1xf32>
    %c0_4 = arith.constant 0 : index
    %c4 = arith.constant 4 : index
    %3 = vector.load %arg2[%c0_4, %c4] : memref<16x128xf32, #tpu.memory_space<vmem>>, vector<10x10xf32>
    %c0_5 = arith.constant 0 : index
    %c14 = arith.constant 14 : index
    %4 = vector.load %arg2[%c0_5, %c14] : memref<16x128xf32, #tpu.memory_space<vmem>>, vector<10x1xf32>
    %c10 = arith.constant 10 : index
    %c0_6 = arith.constant 0 : index
    %5 = vector.load %arg2[%c10, %c0_6] : memref<16x128xf32, #tpu.memory_space<vmem>>, vector<1x10xf32>
    %c10_7 = arith.constant 10 : index
    %c10_8 = arith.constant 10 : index
    %6 = vector.load %arg2[%c10_7, %c10_8] : memref<16x128xf32, #tpu.memory_space<vmem>>, vector<1x1xf32>
    %cst = arith.constant dense<0.000000e+00> : vector<10x128xf32>
    %7 = tpu.matmul %1, %0, %cst {dimension_numbers = #tpu.dot_dimension_numbers<[1], [0], [0], [1], [0, 0, 1, 1], [], []>, precision = #tpu.contract_precision<fp32>} : vector<10x3xf32>, vector<3x128xf32>, vector<10x128xf32> -> vector<10x128xf32>
    %8 = vector.broadcast %2 : vector<10x1xf32> to vector<10x128xf32>
    %9 = arith.addf %7, %8 : vector<10x128xf32>
    %cst_9 = arith.constant 0.000000e+00 : f32
    %10 = vector.broadcast %cst_9 : f32 to vector<10x128xf32>
    %11 = arith.maximumf %9, %10 : vector<10x128xf32>
    %cst_10 = arith.constant dense<0.000000e+00> : vector<10x128xf32>
    %12 = tpu.matmul %3, %11, %cst_10 {dimension_numbers = #tpu.dot_dimension_numbers<[1], [0], [0], [1], [0, 0, 1, 1], [], []>, precision = #tpu.contract_precision<fp32>} : vector<10x10xf32>, vector<10x128xf32>, vector<10x128xf32> -> vector<10x128xf32>
    %13 = vector.broadcast %4 : vector<10x1xf32> to vector<10x128xf32>
    %14 = arith.addf %12, %13 : vector<10x128xf32>
    %cst_11 = arith.constant 0.000000e+00 : f32
    %15 = vector.broadcast %cst_11 : f32 to vector<10x128xf32>
    %16 = arith.maximumf %14, %15 : vector<10x128xf32>
    %cst_12 = arith.constant dense<0.000000e+00> : vector<1x128xf32>
    %17 = tpu.matmul %5, %16, %cst_12 {dimension_numbers = #tpu.dot_dimension_numbers<[1], [0], [0], [1], [0, 0, 1, 1], [], []>, precision = #tpu.contract_precision<fp32>} : vector<1x10xf32>, vector<10x128xf32>, vector<1x128xf32> -> vector<1x128xf32>
    %18 = vector.broadcast %6 : vector<1x1xf32> to vector<1x128xf32>
    %19 = arith.addf %17, %18 : vector<1x128xf32>
    %20 = math.tanh %19 : vector<1x128xf32>
    %cst_13 = arith.constant 2.000000e+00 : f32
    %21 = vector.broadcast %cst_13 : f32 to vector<1x128xf32>
    %22 = arith.mulf %20, %21 : vector<1x128xf32>
    %c0_14 = arith.constant 0 : index
    %c0_15 = arith.constant 0 : index
    %23 = vector.load %arg3[%c0_14, %c0_15] : memref<1x128xf32, #tpu.memory_space<vmem>>, vector<1x128xf32>
    tpu.vector_store %arg3[%c0_14, %c0_15], %22 {strides = array<i32>} : memref<1x128xf32, #tpu.memory_space<vmem>>, vector<1x128xf32>,
    return
  }
  func.func @transform_0(%arg0: i32) -> (i32, i32) {
    %c0_i32 = arith.constant 0 : i32
    %c0_i32_0 = arith.constant 0 : i32
    return %c0_i32, %arg0 : i32, i32
  }
  func.func @transform_1(%arg0: i32) -> (i32, i32) {
    %c0_i32 = arith.constant 0 : i32
    %c0_i32_0 = arith.constant 0 : i32
    %c0_i32_1 = arith.constant 0 : i32
    return %c0_i32, %c0_i32_0 : i32, i32
  }
  func.func @transform_2(%arg0: i32) -> (i32, i32) {
    %c0_i32 = arith.constant 0 : i32
    %c0_i32_0 = arith.constant 0 : i32
    return %c0_i32, %arg0 : i32, i32
  }
}

</mosaic_0001>

<llo_original>
// kernel: tpu_custom_call.1
$region0: #{tpu_custom_call.1}
  #allocation0 [shape = 'u32[]', space=smem, size = 0x4, offset = 0x4, fixed_abs, tag = 'smem constant byte address 0x4 - core index']
  #allocation1 [shape = 'u32[72,128]{1,0:T(1,128)}', space=vmem, size = 0x9000, scoped, tag = 'internal scratch']
  %s0 = inlined_call_operand.hbm [shape: f32[3,256], index: 0, kind: input, shape index: {}]
  %s1 = inlined_call_operand.hbm [shape: f32[16,128], index: 1, kind: input, shape index: {}]
  %s2 = inlined_call_operand.hbm [shape: f32[1,256], index: 2, kind: output, shape index: {}]
  %s3 = sld [smem:[#allocation0]]
  $region49: #{tpu_custom_call.1} parent=0
    _
  %s5 = ssub.s32 1, %s3
  %s6 = scalar_select 0, %s5, %s3
  $region1: #{tpu_custom_call.1} parent=0
    #allocation2 [shape = 'u8[4096]{0}', space=vmem, size = 0x1000, scoped, tag = 'input window, operand 0']
    #allocation3 [shape = 's32[2]{0}', space=sflag, size = 0x8, scoped, tag = 'scoped memory for tpu_custom_call.1']
    #allocation4 [shape = 's32[2]{0}', space=sflag, size = 0x8, scoped, tag = 'scoped memory for tpu_custom_call.1']
    #allocation5 [shape = 'u8[8192]{0}', space=vmem, size = 0x2000, scoped, tag = 'input window, operand 1, single buffered']
    #allocation6 [shape = 's32[1]{0}', space=sflag, size = 0x4, scoped, tag = 'scoped memory for tpu_custom_call.1']
    #allocation7 [shape = 'u8[1024]{0}', space=vmem, size = 0x400, scoped, tag = 'output window, operand 0']
    %7 = vsyncpa [#allocation3], 0
    %s8 = scalar_lea.sflag [#allocation3], 1
    %9 = vsyncpa %s8, 0
    %10 = vsyncpa [#allocation6], 0
    %11 = vsyncpa [#allocation4], 0
    %s12 = scalar_lea.sflag [#allocation4], 1
    %13 = vsyncpa %s12, 0
    loop: start=0, step=1, limit=4
    $region2: #{tpu_custom_call.1} parent=1 // loop_pre_header
      _
    $region3: #{tpu_custom_call.1} parent=1 // loop_header
      %s15 = sphi 0, %s19
      %p16 = scmp.ge.s32.totalorder %s15, 4
      %s25 = sphi 0, %s27
      %s28 = sphi 0, %s25
      %s29 = sphi 0, %s28
      %s45 = sphi 0, %s29
      %s49 = sphi 0, %s49
      %s51 = sphi 0, %s49
      %s52 = sphi 0, %s51
      %s66 = sphi 0, %s52
      %s72 = sphi 0, %s74
      %s75 = sphi 0, %s72
      %s76 = sphi 0, %s75
      %s92 = sphi 0, %s76
    $region4: #{tpu_custom_call.1} parent=1 // loop_header_branch
      %18 = sbr.rel (%p16) target = $region8
    $region5: #{tpu_custom_call.1} parent=1 // loop_body
      %s20 = ssub.s32 %s15, 1
      %s21 = ssub.s32 %s15, 2
      %s22 = sadd.s32 %s15, 1
      %s23 = ssub.s32 %s15, %s22
      %p24 = scmp.eq.s32.totalorder %s23, 0
      %s26 = sadd.s32 %s25, 1
      %s27 = scalar_select %p24, %s25, %s26
      %p30 = pneg %p24
      %p31 = scmp.eq.s32.totalorder %s15, 1
      %p32 = por %p30, %p31
      %p33 = scmp.ne.s32.totalorder %s25, %s28
      %p34 = scmp.eq.s32.totalorder %s15, 0
      %p35 = por %p33, %p34
      %p36 = scmp.ne.s32.totalorder %s25, %s28
      %p37 = scmp.eq.s32.totalorder %s20, 1
      %p38 = por %p36, %p37
      %p39 = scmp.ne.s32.totalorder %s28, %s29
      %p40 = scmp.eq.s32.totalorder %s20, 0
      %p41 = por %p39, %p40
      %p42 = scmp.ne.s32.totalorder %s28, %s29
      %p43 = scmp.eq.s32.totalorder %s21, 1
      %p44 = por %p42, %p43
      %p46 = scmp.ne.s32.totalorder %s29, %s45
      %p47 = scmp.eq.s32.totalorder %s21, 0
      %p48 = por %p46, %p47
      %s50 = sadd.s32 %s49, 1
      %p53 = scmp.eq.s32.totalorder %s15, 1
      %p54 = scmp.ne.s32.totalorder %s49, %s51
      %p55 = scmp.eq.s32.totalorder %s15, 0
      %p56 = por %p54, %p55
      %p57 = scmp.ne.s32.totalorder %s49, %s51
      %p58 = scmp.eq.s32.totalorder %s20, 1
      %p59 = por %p57, %p58
      %p60 = scmp.ne.s32.totalorder %s51, %s52
      %p61 = scmp.eq.s32.totalorder %s20, 0
      %p62 = por %p60, %p61
      %p63 = scmp.ne.s32.totalorder %s51, %s52
      %p64 = scmp.eq.s32.totalorder %s21, 1
      %p65 = por %p63, %p64
      %p67 = scmp.ne.s32.totalorder %s52, %s66
      %p68 = scmp.eq.s32.totalorder %s21, 0
      %p69 = por %p67, %p68
      %s70 = ssub.s32 %s15, %s22
      %p71 = scmp.eq.s32.totalorder %s70, 0
      %s73 = sadd.s32 %s72, 1
      %s74 = scalar_select %p71, %s72, %s73
      %p77 = pneg %p71
      %p78 = scmp.eq.s32.totalorder %s15, 1
      %p79 = por %p77, %p78
      %p80 = scmp.ne.s32.totalorder %s72, %s75
      %p81 = scmp.eq.s32.totalorder %s15, 0
      %p82 = por %p80, %p81
      %p83 = scmp.ne.s32.totalorder %s72, %s75
      %p84 = scmp.eq.s32.totalorder %s20, 1
      %p85 = por %p83, %p84
      %p86 = scmp.ne.s32.totalorder %s75, %s76
      %p87 = scmp.eq.s32.totalorder %s20, 0
      %p88 = por %p86, %p87
      %p89 = scmp.ne.s32.totalorder %s75, %s76
      %p90 = scmp.eq.s32.totalorder %s21, 1
      %p91 = por %p89, %p90
      %p93 = scmp.ne.s32.totalorder %s76, %s92
      %p94 = scmp.eq.s32.totalorder %s21, 0
      %p95 = por %p93, %p94
      %p96 = scmp.le.s32.totalorder 1, %s15
      %p97 = scmp.lt.s32.totalorder %s15, 3
      %p98 = pnand %p96, %p97
      %p99 = pneg %p98
      // Predicated region
      $region9: #{tpu_custom_call.1} parent=5 // pred_check
        _
      $region10: #{tpu_custom_call.1} parent=5 // pred_check_branch
        %101 = sbr.rel (%p98) target = $region12
      $region11: #{tpu_custom_call.1} parent=5 // pred_region
        %s102 = ssub.s32 %s15, 1
        // Predicated region
        $region13: #{tpu_custom_call.1} parent=11 // pred_check
          %p103 = pneg %p62
        $region14: #{tpu_custom_call.1} parent=11 // pred_check_branch
          %105 = sbr.rel (%p103) target = $region16
        $region15: #{tpu_custom_call.1} parent=11 // pred_region
          %107 = vsyncadd [#allocation6], 0
          %s108 = sshll.u32 %s1, 4
          %s109 = int_to_ptr.hbm [resolvable:$true] %s108
          %s110 = sshll.u32 [#allocation5], 4
          %s111 = int_to_ptr.vmem [resolvable:$true] %s110
          %116 = dma.hbm_to_vmem [thread:$0]  %s109, 256, %s111, [#allocation6], 128, 128, 8
        $region16: #{tpu_custom_call.1} parent=11 // pred_fallthru
          _
      $region12: #{tpu_custom_call.1} parent=5 // pred_fallthru
        _
      %p117 = scmp.lt.s32.totalorder %s15, 2
      // Predicated region
      $region17: #{tpu_custom_call.1} parent=5 // pred_check
        %p118 = pneg %p117
      $region18: #{tpu_custom_call.1} parent=5 // pred_check_branch
        %120 = sbr.rel (%p118) target = $region20
      $region19: #{tpu_custom_call.1} parent=5 // pred_region
        // Predicated region
        $region21: #{tpu_custom_call.1} parent=19 // pred_check
          %p121 = pneg %p35
        $region22: #{tpu_custom_call.1} parent=19 // pred_check_branch
          %123 = sbr.rel (%p121) target = $region24
        $region23: #{tpu_custom_call.1} parent=19 // pred_region
          %s124 = sand.u32 %s25, 1
          %s125 = scalar_lea.sflag [#allocation3], %s124
          %s126 = sand.u32 %s25, 1
          %s127 = smul.addr %s126, 4
          %s128 = scalar_lea.vmem [#allocation2], %s127
          %130 = vsyncadd %s125, 0
          %s131 = smul.addr %s15, 4
          %s132 = scalar_lea.hbm %s0, %s131
          %s134 = sshll.u32 %s132, 4
          %s135 = int_to_ptr.hbm [resolvable:$true] %s134
          %s136 = sshll.u32 %s128, 4
          %s137 = int_to_ptr.vmem [resolvable:$true] %s136
          %139 = dma.hbm_to_vmem [thread:$0]  %s135, 64, %s137, %s125
        $region24: #{tpu_custom_call.1} parent=19 // pred_fallthru
          _
      $region20: #{tpu_custom_call.1} parent=5 // pred_fallthru
        _
      %p140 = scmp.le.s32.totalorder 1, %s15
      %p141 = scmp.lt.s32.totalorder %s15, 3
      %p142 = pnand %p140, %p141
      %p143 = pneg %p142
      // Predicated region
      $region25: #{tpu_custom_call.1} parent=5 // pred_check
        _
      $region26: #{tpu_custom_call.1} parent=5 // pred_check_branch
        %145 = sbr.rel (%p142) target = $region28
      $region27: #{tpu_custom_call.1} parent=5 // pred_region
        %s146 = ssub.s32 %s15, 1
        %s147 = sand.u32 %s28, 1
        %s148 = scalar_lea.sflag [#allocation3], %s147
        %s149 = sand.u32 %s28, 1
        %s150 = smul.addr %s149, 4
        %s151 = scalar_lea.vmem [#allocation2], %s150
        // Predicated region
        $region29: #{tpu_custom_call.1} parent=27 // pred_check
          %p152 = pneg %p41
        $region30: #{tpu_custom_call.1} parent=27 // pred_check_branch
          %154 = sbr.rel (%p152) target = $region32
        $region31: #{tpu_custom_call.1} parent=27 // pred_region
          %156 = dma.done %s148, 64
        $region32: #{tpu_custom_call.1} parent=27 // pred_fallthru
          _
        // Predicated region
        $region33: #{tpu_custom_call.1} parent=27 // pred_check
          %p157 = pneg %p62
        $region34: #{tpu_custom_call.1} parent=27 // pred_check_branch
          %159 = sbr.rel (%p157) target = $region36
        $region35: #{tpu_custom_call.1} parent=27 // pred_region
          %161 = dma.done [#allocation6], 256
        $region36: #{tpu_custom_call.1} parent=27 // pred_fallthru
          _
        %s162 = sand.u32 %s28, 1
        %s163 = scalar_lea.sflag [#allocation3], %s162
        %s164 = sand.u32 %s28, 1
        %s165 = smul.addr %s164, 4
        %s166 = scalar_lea.vmem [#allocation2], %s165
        %p167 = pneg %p41
        %p168 = pneg %p38
        %p169 = pneg %p62
        %p170 = pneg %p59
        %p171 = pneg %p88
        %p172 = pneg %p85
        %s173 = sand.u32 %s75, 1
        %s174 = scalar_lea.sflag [#allocation4], %s173
        %s175 = sand.u32 %s75, 1
        %s176 = scalar_lea.vmem [#allocation7], %s175
        %v177 = vld [vmem:[%s151] sm:$0x7]
        %v178 = vld [vmem:[#allocation5] sm:$0xff]
        %v179 = vld [vmem:[#allocation5 + $0x8] sm:$0x3]
        %v180 = vld [vmem:[#allocation5 + $0xa] sm:$0x1]
        %182 = vset.pattern.permute.xlu0 3
        %183 = vperm.xlu0 %182, %v178
        %v184 = vpop.permute.xlu0 %183
        %187 = vset.pattern.permute.xlu0 3
        %188 = vperm.xlu0 %187, %v179
        %v189 = vpop.permute.xlu0 %188
        %vm191 = vcmask 23552
        %v192 = vsel %vm191, %v178, 0
        %v194 = vsel %vm191, %v179, 0
        %vm196 = vcmask 1042432
        %v198 = vsel %vm196, %v177, 0
        %200 = vmatpush.msra.mxu0 0.0
        %201 = vmatpush.msra.mxu0 0.0
        %202 = vmatpush.msra.mxu0 0.0
        %203 = vmatpush.msra.mxu0 0.0
        %204 = vmatpush.msra.mxu0 0.0
        %205 = vmatpush.msra.mxu0 0.0
        %206 = vmatpush.msra.mxu0 0.0
        %207 = vmatpush.msra.mxu0 0.0
        %208 = vmatpush.msra.mxu0 0.0
        %209 = vmatpush.msra.mxu0 0.0
        %210 = vmatpush.msra.mxu0 0.0
        %211 = vmatpush.msra.mxu0 0.0
        %212 = vmatpush.msra.mxu0 0.0
        %213 = vmatpush.msra.mxu0 0.0
        %214 = vmatpush.msra.mxu0 0.0
        %v215 = vand.u32 %v198, 4294901760
        %216 = vmatpush.msra.mxu0 %v215
        %v217 = vand.u32 %v192, 4294901760
        %v218 = vsub.f32 %v192, %v217
        %v219 = vand.u32 %v218, 4294901760
        %v220 = vsub.f32 %v218, %v219
        %v221 = vand.u32 %v220, 4294901760
        %222 = vmatmul.f32.gmra.mxu0 %v221
        %v223 = vpop.f32.mrf.mxu0
        %v224 = vadd.f32 %v184, %v223
        %v225 = vand.u32 %v194, 4294901760
        %v226 = vsub.f32 %v194, %v225
        %v227 = vand.u32 %v226, 4294901760
        %v228 = vsub.f32 %v226, %v227
        %v229 = vand.u32 %v228, 4294901760
        %230 = vmatmul.f32.gmra.mxu0 %v229
        %v231 = vpop.f32.mrf.mxu0
        %v232 = vadd.f32 %v189, %v231
        %233 = vdwg.mxu0
        %234 = vmatpush.msra.mxu0 0.0
        %235 = vmatpush.msra.mxu0 0.0
        %236 = vmatpush.msra.mxu0 0.0
        %237 = vmatpush.msra.mxu0 0.0
        %238 = vmatpush.msra.mxu0 0.0
        %239 = vmatpush.msra.mxu0 0.0
        %240 = vmatpush.msra.mxu0 0.0
        %241 = vmatpush.msra.mxu0 0.0
        %242 = vmatpush.msra.mxu0 0.0
        %243 = vmatpush.msra.mxu0 0.0
        %244 = vmatpush.msra.mxu0 0.0
        %245 = vmatpush.msra.mxu0 0.0
        %246 = vmatpush.msra.mxu0 0.0
        %247 = vmatpush.msra.mxu0 0.0
        %248 = vmatpush.msra.mxu0 0.0
        %v249 = vand.u32 %v198, 4294901760
        %v250 = vsub.f32 %v198, %v249
        %v251 = vand.u32 %v250, 4294901760
        %v252 = vsub.f32 %v250, %v251
        %v253 = vand.u32 %v252, 4294901760
        %254 = vmatpush.msra.mxu0 %v253
        %v255 = vand.u32 %v192, 4294901760
        %256 = vmatmul.f32.gmra.mxu0 %v255
        %v257 = vpop.f32.mrf.mxu0
        %v258 = vadd.f32 %v224, %v257
        %v259 = vand.u32 %v194, 4294901760
        %260 = vmatmul.f32.gmra.mxu0 %v259
        %v261 = vpop.f32.mrf.mxu0
        %v262 = vadd.f32 %v232, %v261
        %263 = vdwg.mxu0
        %264 = vmatpush.msra.mxu0 0.0
        %265 = vmatpush.msra.mxu0 0.0
        %266 = vmatpush.msra.mxu0 0.0
        %267 = vmatpush.msra.mxu0 0.0
        %268 = vmatpush.msra.mxu0 0.0
        %269 = vmatpush.msra.mxu0 0.0
        %270 = vmatpush.msra.mxu0 0.0
        %271 = vmatpush.msra.mxu0 0.0
        %272 = vmatpush.msra.mxu0 0.0
        %273 = vmatpush.msra.mxu0 0.0
        %274 = vmatpush.msra.mxu0 0.0
        %275 = vmatpush.msra.mxu0 0.0
        %276 = vmatpush.msra.mxu0 0.0
        %277 = vmatpush.msra.mxu0 0.0
        %278 = vmatpush.msra.mxu0 0.0
        %v279 = vand.u32 %v198, 4294901760
        %v280 = vsub.f32 %v198, %v279
        %281 = vmatpush.msra.mxu0 %v280
        %v282 = vand.u32 %v192, 4294901760
        %v283 = vsub.f32 %v192, %v282
        %284 = vmatmul.f32.gmra.mxu0 %v283
        %v285 = vpop.f32.mrf.mxu0
        %v286 = vadd.f32 %v258, %v285
        %v287 = vand.u32 %v194, 4294901760
        %v288 = vsub.f32 %v194, %v287
        %289 = vmatmul.f32.gmra.mxu0 %v288
        %v290 = vpop.f32.mrf.mxu0
        %v291 = vadd.f32 %v262, %v290
        %292 = vdwg.mxu0
        %293 = vmatpush.msra.mxu0 0.0
        %294 = vmatpush.msra.mxu0 0.0
        %295 = vmatpush.msra.mxu0 0.0
        %296 = vmatpush.msra.mxu0 0.0
        %297 = vmatpush.msra.mxu0 0.0
        %298 = vmatpush.msra.mxu0 0.0
        %299 = vmatpush.msra.mxu0 0.0
        %300 = vmatpush.msra.mxu0 0.0
        %301 = vmatpush.msra.mxu0 0.0
        %302 = vmatpush.msra.mxu0 0.0
        %303 = vmatpush.msra.mxu0 0.0
        %304 = vmatpush.msra.mxu0 0.0
        %305 = vmatpush.msra.mxu0 0.0
        %306 = vmatpush.msra.mxu0 0.0
        %307 = vmatpush.msra.mxu0 0.0
        %v308 = vand.u32 %v198, 4294901760
        %309 = vmatpush.msra.mxu0 %v308
        %v310 = vand.u32 %v192, 4294901760
        %v311 = vsub.f32 %v192, %v310
        %v312 = vand.u32 %v311, 4294901760
        %313 = vmatmul.f32.gmra.mxu0 %v312
        %v314 = vpop.f32.mrf.mxu0
        %v315 = vadd.f32 %v286, %v314
        %v316 = vand.u32 %v194, 4294901760
        %v317 = vsub.f32 %v194, %v316
        %v318 = vand.u32 %v317, 4294901760
        %319 = vmatmul.f32.gmra.mxu0 %v318
        %v320 = vpop.f32.mrf.mxu0
        %v321 = vadd.f32 %v291, %v320
        %322 = vdwg.mxu0
        %323 = vmatpush.msra.mxu0 0.0
        %324 = vmatpush.msra.mxu0 0.0
        %325 = vmatpush.msra.mxu0 0.0
        %326 = vmatpush.msra.mxu0 0.0
        %327 = vmatpush.msra.mxu0 0.0
        %328 = vmatpush.msra.mxu0 0.0
        %329 = vmatpush.msra.mxu0 0.0
        %330 = vmatpush.msra.mxu0 0.0
        %331 = vmatpush.msra.mxu0 0.0
        %332 = vmatpush.msra.mxu0 0.0
        %333 = vmatpush.msra.mxu0 0.0
        %334 = vmatpush.msra.mxu0 0.0
        %335 = vmatpush.msra.mxu0 0.0
        %336 = vmatpush.msra.mxu0 0.0
        %337 = vmatpush.msra.mxu0 0.0
        %v338 = vand.u32 %v198, 4294901760
        %v339 = vsub.f32 %v198, %v338
        %v340 = vand.u32 %v339, 4294901760
        %341 = vmatpush.msra.mxu0 %v340
        %v342 = vand.u32 %v192, 4294901760
        %343 = vmatmul.f32.gmra.mxu0 %v342
        %v344 = vpop.f32.mrf.mxu0
        %v345 = vadd.f32 %v315, %v344
        %v346 = vand.u32 %v194, 4294901760
        %347 = vmatmul.f32.gmra.mxu0 %v346
        %v348 = vpop.f32.mrf.mxu0
        %v349 = vadd.f32 %v321, %v348
        %350 = vdwg.mxu0
        %351 = vmatpush.msra.mxu0 0.0
        %352 = vmatpush.msra.mxu0 0.0
        %353 = vmatpush.msra.mxu0 0.0
        %354 = vmatpush.msra.mxu0 0.0
        %355 = vmatpush.msra.mxu0 0.0
        %356 = vmatpush.msra.mxu0 0.0
        %357 = vmatpush.msra.mxu0 0.0
        %358 = vmatpush.msra.mxu0 0.0
        %359 = vmatpush.msra.mxu0 0.0
        %360 = vmatpush.msra.mxu0 0.0
        %361 = vmatpush.msra.mxu0 0.0
        %362 = vmatpush.msra.mxu0 0.0
        %363 = vmatpush.msra.mxu0 0.0
        %364 = vmatpush.msra.mxu0 0.0
        %365 = vmatpush.msra.mxu0 0.0
        %v366 = vand.u32 %v198, 4294901760
        %367 = vmatpush.msra.mxu0 %v366
        %v368 = vand.u32 %v192, 4294901760
        %369 = vmatmul.f32.gmra.mxu0 %v368
        %v370 = vpop.f32.mrf.mxu0
        %v371 = vadd.f32 %v345, %v370
        %v372 = vand.u32 %v194, 4294901760
        %373 = vmatmul.f32.gmra.mxu0 %v372
        %v374 = vpop.f32.mrf.mxu0
        %v375 = vadd.f32 %v349, %v374
        %376 = vdwg.mxu0
        %v377 = vmax.f32 %v371, 0.0
        %v378 = vmax.f32 %v375, 0.0
        %379 = vset.pattern.permute.xlu0 14
        %380 = vperm.xlu0 %379, %v178
        %v381 = vpop.permute.xlu0 %380
        %383 = vset.pattern.permute.xlu0 14
        %384 = vperm.xlu0 %383, %v179
        %v385 = vpop.permute.xlu0 %384
        %387 = vrot.lane.b32.xlu0 %v178, 124
        %v388 = vpop.permute.xlu0 %387
        %389 = vrot.lane.b32.xlu0 %v179, 124
        %v390 = vpop.permute.xlu0 %389
        %vm391 = vcmask 80896
        %v392 = vsel %vm391, %v388, 0
        %v394 = vsel %vm391, %v390, 0
        %vm396 = vcmask 1041408
        %v398 = vsel %vm396, %v378, 0
        %400 = vmatpush.msra.mxu0 0.0
        %401 = vmatpush.msra.mxu0 0.0
        %402 = vmatpush.msra.mxu0 0.0
        %403 = vmatpush.msra.mxu0 0.0
        %404 = vmatpush.msra.mxu0 0.0
        %405 = vmatpush.msra.mxu0 0.0
        %406 = vmatpush.msra.mxu0 0.0
        %407 = vmatpush.msra.mxu0 0.0
        %408 = vmatpush.msra.mxu0 0.0
        %409 = vmatpush.msra.mxu0 0.0
        %410 = vmatpush.msra.mxu0 0.0
        %411 = vmatpush.msra.mxu0 0.0
        %412 = vmatpush.msra.mxu0 0.0
        %413 = vmatpush.msra.mxu0 0.0
        %v414 = vand.u32 %v398, 4294901760
        %415 = vmatpush.msra.mxu0 %v414
        %v416 = vand.u32 %v377, 4294901760
        %417 = vmatpush.msra.mxu0 %v416
        %v418 = vand.u32 %v392, 4294901760
        %v419 = vsub.f32 %v392, %v418
        %v420 = vand.u32 %v419, 4294901760
        %v421 = vsub.f32 %v419, %v420
        %v422 = vand.u32 %v421, 4294901760
        %423 = vmatmul.f32.gmra.mxu0 %v422
        %v424 = vpop.f32.mrf.mxu0
        %v425 = vadd.f32 %v381, %v424
        %v426 = vand.u32 %v394, 4294901760
        %v427 = vsub.f32 %v394, %v426
        %v428 = vand.u32 %v427, 4294901760
        %v429 = vsub.f32 %v427, %v428
        %v430 = vand.u32 %v429, 4294901760
        %431 = vmatmul.f32.gmra.mxu0 %v430
        %v432 = vpop.f32.mrf.mxu0
        %v433 = vadd.f32 %v385, %v432
        %434 = vdwg.mxu0
        %435 = vmatpush.msra.mxu0 0.0
        %436 = vmatpush.msra.mxu0 0.0
        %437 = vmatpush.msra.mxu0 0.0
        %438 = vmatpush.msra.mxu0 0.0
        %439 = vmatpush.msra.mxu0 0.0
        %440 = vmatpush.msra.mxu0 0.0
        %441 = vmatpush.msra.mxu0 0.0
        %442 = vmatpush.msra.mxu0 0.0
        %443 = vmatpush.msra.mxu0 0.0
        %444 = vmatpush.msra.mxu0 0.0
        %445 = vmatpush.msra.mxu0 0.0
        %446 = vmatpush.msra.mxu0 0.0
        %447 = vmatpush.msra.mxu0 0.0
        %448 = vmatpush.msra.mxu0 0.0
        %v449 = vand.u32 %v398, 4294901760
        %v450 = vsub.f32 %v398, %v449
        %v451 = vand.u32 %v450, 4294901760
        %v452 = vsub.f32 %v450, %v451
        %v453 = vand.u32 %v452, 4294901760
        %454 = vmatpush.msra.mxu0 %v453
        %v455 = vand.u32 %v377, 4294901760
        %v456 = vsub.f32 %v377, %v455
        %v457 = vand.u32 %v456, 4294901760
        %v458 = vsub.f32 %v456, %v457
        %v459 = vand.u32 %v458, 4294901760
        %460 = vmatpush.msra.mxu0 %v459
        %v461 = vand.u32 %v392, 4294901760
        %462 = vmatmul.f32.gmra.mxu0 %v461
        %v463 = vpop.f32.mrf.mxu0
        %v464 = vadd.f32 %v425, %v463
        %v465 = vand.u32 %v394, 4294901760
        %466 = vmatmul.f32.gmra.mxu0 %v465
        %v467 = vpop.f32.mrf.mxu0
        %v468 = vadd.f32 %v433, %v467
        %469 = vdwg.mxu0
        %470 = vmatpush.msra.mxu0 0.0
        %471 = vmatpush.msra.mxu0 0.0
        %472 = vmatpush.msra.mxu0 0.0
        %473 = vmatpush.msra.mxu0 0.0
        %474 = vmatpush.msra.mxu0 0.0
        %475 = vmatpush.msra.mxu0 0.0
        %476 = vmatpush.msra.mxu0 0.0
        %477 = vmatpush.msra.mxu0 0.0
        %478 = vmatpush.msra.mxu0 0.0
        %479 = vmatpush.msra.mxu0 0.0
        %480 = vmatpush.msra.mxu0 0.0
        %481 = vmatpush.msra.mxu0 0.0
        %482 = vmatpush.msra.mxu0 0.0
        %483 = vmatpush.msra.mxu0 0.0
        %v484 = vand.u32 %v398, 4294901760
        %v485 = vsub.f32 %v398, %v484
        %486 = vmatpush.msra.mxu0 %v485
        %v487 = vand.u32 %v377, 4294901760
        %v488 = vsub.f32 %v377, %v487
        %489 = vmatpush.msra.mxu0 %v488
        %v490 = vand.u32 %v392, 4294901760
        %v491 = vsub.f32 %v392, %v490
        %492 = vmatmul.f32.gmra.mxu0 %v491
        %v493 = vpop.f32.mrf.mxu0
        %v494 = vadd.f32 %v464, %v493
        %v495 = vand.u32 %v394, 4294901760
        %v496 = vsub.f32 %v394, %v495
        %497 = vmatmul.f32.gmra.mxu0 %v496
        %v498 = vpop.f32.mrf.mxu0
        %v499 = vadd.f32 %v468, %v498
        %500 = vdwg.mxu0
        %501 = vmatpush.msra.mxu0 0.0
        %502 = vmatpush.msra.mxu0 0.0
        %503 = vmatpush.msra.mxu0 0.0
        %504 = vmatpush.msra.mxu0 0.0
        %505 = vmatpush.msra.mxu0 0.0
        %506 = vmatpush.msra.mxu0 0.0
        %507 = vmatpush.msra.mxu0 0.0
        %508 = vmatpush.msra.mxu0 0.0
        %509 = vmatpush.msra.mxu0 0.0
        %510 = vmatpush.msra.mxu0 0.0
        %511 = vmatpush.msra.mxu0 0.0
        %512 = vmatpush.msra.mxu0 0.0
        %513 = vmatpush.msra.mxu0 0.0
        %514 = vmatpush.msra.mxu0 0.0
        %v515 = vand.u32 %v398, 4294901760
        %516 = vmatpush.msra.mxu0 %v515
        %v517 = vand.u32 %v377, 4294901760
        %518 = vmatpush.msra.mxu0 %v517
        %v519 = vand.u32 %v392, 4294901760
        %v520 = vsub.f32 %v392, %v519
        %v521 = vand.u32 %v520, 4294901760
        %522 = vmatmul.f32.gmra.mxu0 %v521
        %v523 = vpop.f32.mrf.mxu0
        %v524 = vadd.f32 %v494, %v523
        %v525 = vand.u32 %v394, 4294901760
        %v526 = vsub.f32 %v394, %v525
        %v527 = vand.u32 %v526, 4294901760
        %528 = vmatmul.f32.gmra.mxu0 %v527
        %v529 = vpop.f32.mrf.mxu0
        %v530 = vadd.f32 %v499, %v529
        %531 = vdwg.mxu0
        %532 = vmatpush.msra.mxu0 0.0
        %533 = vmatpush.msra.mxu0 0.0
        %534 = vmatpush.msra.mxu0 0.0
        %535 = vmatpush.msra.mxu0 0.0
        %536 = vmatpush.msra.mxu0 0.0
        %537 = vmatpush.msra.mxu0 0.0
        %538 = vmatpush.msra.mxu0 0.0
        %539 = vmatpush.msra.mxu0 0.0
        %540 = vmatpush.msra.mxu0 0.0
        %541 = vmatpush.msra.mxu0 0.0
        %542 = vmatpush.msra.mxu0 0.0
        %543 = vmatpush.msra.mxu0 0.0
        %544 = vmatpush.msra.mxu0 0.0
        %545 = vmatpush.msra.mxu0 0.0
        %v546 = vand.u32 %v398, 4294901760
        %v547 = vsub.f32 %v398, %v546
        %v548 = vand.u32 %v547, 4294901760
        %549 = vmatpush.msra.mxu0 %v548
        %v550 = vand.u32 %v377, 4294901760
        %v551 = vsub.f32 %v377, %v550
        %v552 = vand.u32 %v551, 4294901760
        %553 = vmatpush.msra.mxu0 %v552
        %v554 = vand.u32 %v392, 4294901760
        %555 = vmatmul.f32.gmra.mxu0 %v554
        %v556 = vpop.f32.mrf.mxu0
        %v557 = vadd.f32 %v524, %v556
        %v558 = vand.u32 %v394, 4294901760
        %559 = vmatmul.f32.gmra.mxu0 %v558
        %v560 = vpop.f32.mrf.mxu0
        %v561 = vadd.f32 %v530, %v560
        %562 = vdwg.mxu0
        %563 = vmatpush.msra.mxu0 0.0
        %564 = vmatpush.msra.mxu0 0.0
        %565 = vmatpush.msra.mxu0 0.0
        %566 = vmatpush.msra.mxu0 0.0
        %567 = vmatpush.msra.mxu0 0.0
        %568 = vmatpush.msra.mxu0 0.0
        %569 = vmatpush.msra.mxu0 0.0
        %570 = vmatpush.msra.mxu0 0.0
        %571 = vmatpush.msra.mxu0 0.0
        %572 = vmatpush.msra.mxu0 0.0
        %573 = vmatpush.msra.mxu0 0.0
        %574 = vmatpush.msra.mxu0 0.0
        %575 = vmatpush.msra.mxu0 0.0
        %576 = vmatpush.msra.mxu0 0.0
        %v577 = vand.u32 %v398, 4294901760
        %578 = vmatpush.msra.mxu0 %v577
        %v579 = vand.u32 %v377, 4294901760
        %580 = vmatpush.msra.mxu0 %v579
        %v581 = vand.u32 %v392, 4294901760
        %582 = vmatmul.f32.gmra.mxu0 %v581
        %v583 = vpop.f32.mrf.mxu0
        %v584 = vadd.f32 %v557, %v583
        %v585 = vand.u32 %v394, 4294901760
        %586 = vmatmul.f32.gmra.mxu0 %v585
        %v587 = vpop.f32.mrf.mxu0
        %v588 = vadd.f32 %v561, %v587
        %589 = vdwg.mxu0
        %v590 = vmax.f32 %v584, 0.0
        %v591 = vmax.f32 %v588, 0.0
        %593 = vset.pattern.permute.xlu0 10
        %594 = vperm.xlu0 %593, %v180
        %v595 = vpop.permute.xlu0 %594
        %v597 = vsel %vm391, %v180, 0
        %v600 = vsel %vm396, %v591, 0
        %602 = vmatpush.msra.mxu0 0.0
        %603 = vmatpush.msra.mxu0 0.0
        %604 = vmatpush.msra.mxu0 0.0
        %605 = vmatpush.msra.mxu0 0.0
        %606 = vmatpush.msra.mxu0 0.0
        %607 = vmatpush.msra.mxu0 0.0
        %608 = vmatpush.msra.mxu0 0.0
        %609 = vmatpush.msra.mxu0 0.0
        %610 = vmatpush.msra.mxu0 0.0
        %611 = vmatpush.msra.mxu0 0.0
        %612 = vmatpush.msra.mxu0 0.0
        %613 = vmatpush.msra.mxu0 0.0
        %614 = vmatpush.msra.mxu0 0.0
        %615 = vmatpush.msra.mxu0 0.0
        %v616 = vand.u32 %v600, 4294901760
        %617 = vmatpush.msra.mxu0 %v616
        %v618 = vand.u32 %v590, 4294901760
        %619 = vmatpush.msra.mxu0 %v618
        %v620 = vand.u32 %v597, 4294901760
        %v621 = vsub.f32 %v597, %v620
        %v622 = vand.u32 %v621, 4294901760
        %v623 = vsub.f32 %v621, %v622
        %v624 = vand.u32 %v623, 4294901760
        %625 = vmatmul.f32.gmra.mxu0 %v624
        %v626 = vpop.f32.mrf.mxu0
        %v627 = vadd.f32 %v595, %v626
        %628 = vdwg.mxu0
        %629 = vmatpush.msra.mxu0 0.0
        %630 = vmatpush.msra.mxu0 0.0
        %631 = vmatpush.msra.mxu0 0.0
        %632 = vmatpush.msra.mxu0 0.0
        %633 = vmatpush.msra.mxu0 0.0
        %634 = vmatpush.msra.mxu0 0.0
        %635 = vmatpush.msra.mxu0 0.0
        %636 = vmatpush.msra.mxu0 0.0
        %637 = vmatpush.msra.mxu0 0.0
        %638 = vmatpush.msra.mxu0 0.0
        %639 = vmatpush.msra.mxu0 0.0
        %640 = vmatpush.msra.mxu0 0.0
        %641 = vmatpush.msra.mxu0 0.0
        %642 = vmatpush.msra.mxu0 0.0
        %v643 = vand.u32 %v600, 4294901760
        %v644 = vsub.f32 %v600, %v643
        %v645 = vand.u32 %v644, 4294901760
        %v646 = vsub.f32 %v644, %v645
        %v647 = vand.u32 %v646, 4294901760
        %648 = vmatpush.msra.mxu0 %v647
        %v649 = vand.u32 %v590, 4294901760
        %v650 = vsub.f32 %v590, %v649
        %v651 = vand.u32 %v650, 4294901760
        %v652 = vsub.f32 %v650, %v651
        %v653 = vand.u32 %v652, 4294901760
        %654 = vmatpush.msra.mxu0 %v653
        %v655 = vand.u32 %v597, 4294901760
        %656 = vmatmul.f32.gmra.mxu0 %v655
        %v657 = vpop.f32.mrf.mxu0
        %v658 = vadd.f32 %v627, %v657
        %659 = vdwg.mxu0
        %660 = vmatpush.msra.mxu0 0.0
        %661 = vmatpush.msra.mxu0 0.0
        %662 = vmatpush.msra.mxu0 0.0
        %663 = vmatpush.msra.mxu0 0.0
        %664 = vmatpush.msra.mxu0 0.0
        %665 = vmatpush.msra.mxu0 0.0
        %666 = vmatpush.msra.mxu0 0.0
        %667 = vmatpush.msra.mxu0 0.0
        %668 = vmatpush.msra.mxu0 0.0
        %669 = vmatpush.msra.mxu0 0.0
        %670 = vmatpush.msra.mxu0 0.0
        %671 = vmatpush.msra.mxu0 0.0
        %672 = vmatpush.msra.mxu0 0.0
        %673 = vmatpush.msra.mxu0 0.0
        %v674 = vand.u32 %v600, 4294901760
        %v675 = vsub.f32 %v600, %v674
        %676 = vmatpush.msra.mxu0 %v675
        %v677 = vand.u32 %v590, 4294901760
        %v678 = vsub.f32 %v590, %v677
        %679 = vmatpush.msra.mxu0 %v678
        %v680 = vand.u32 %v597, 4294901760
        %v681 = vsub.f32 %v597, %v680
        %682 = vmatmul.f32.gmra.mxu0 %v681
        %v683 = vpop.f32.mrf.mxu0
        %v684 = vadd.f32 %v658, %v683
        %685 = vdwg.mxu0
        %686 = vmatpush.msra.mxu0 0.0
        %687 = vmatpush.msra.mxu0 0.0
        %688 = vmatpush.msra.mxu0 0.0
        %689 = vmatpush.msra.mxu0 0.0
        %690 = vmatpush.msra.mxu0 0.0
        %691 = vmatpush.msra.mxu0 0.0
        %692 = vmatpush.msra.mxu0 0.0
        %693 = vmatpush.msra.mxu0 0.0
        %694 = vmatpush.msra.mxu0 0.0
        %695 = vmatpush.msra.mxu0 0.0
        %696 = vmatpush.msra.mxu0 0.0
        %697 = vmatpush.msra.mxu0 0.0
        %698 = vmatpush.msra.mxu0 0.0
        %699 = vmatpush.msra.mxu0 0.0
        %v700 = vand.u32 %v600, 4294901760
        %701 = vmatpush.msra.mxu0 %v700
        %v702 = vand.u32 %v590, 4294901760
        %703 = vmatpush.msra.mxu0 %v702
        %v704 = vand.u32 %v597, 4294901760
        %v705 = vsub.f32 %v597, %v704
        %v706 = vand.u32 %v705, 4294901760
        %707 = vmatmul.f32.gmra.mxu0 %v706
        %v708 = vpop.f32.mrf.mxu0
        %v709 = vadd.f32 %v684, %v708
        %710 = vdwg.mxu0
        %711 = vmatpush.msra.mxu0 0.0
        %712 = vmatpush.msra.mxu0 0.0
        %713 = vmatpush.msra.mxu0 0.0
        %714 = vmatpush.msra.mxu0 0.0
        %715 = vmatpush.msra.mxu0 0.0
        %716 = vmatpush.msra.mxu0 0.0
        %717 = vmatpush.msra.mxu0 0.0
        %718 = vmatpush.msra.mxu0 0.0
        %719 = vmatpush.msra.mxu0 0.0
        %720 = vmatpush.msra.mxu0 0.0
        %721 = vmatpush.msra.mxu0 0.0
        %722 = vmatpush.msra.mxu0 0.0
        %723 = vmatpush.msra.mxu0 0.0
        %724 = vmatpush.msra.mxu0 0.0
        %v725 = vand.u32 %v600, 4294901760
        %v726 = vsub.f32 %v600, %v725
        %v727 = vand.u32 %v726, 4294901760
        %728 = vmatpush.msra.mxu0 %v727
        %v729 = vand.u32 %v590, 4294901760
        %v730 = vsub.f32 %v590, %v729
        %v731 = vand.u32 %v730, 4294901760
        %732 = vmatpush.msra.mxu0 %v731
        %v733 = vand.u32 %v597, 4294901760
        %734 = vmatmul.f32.gmra.mxu0 %v733
        %v735 = vpop.f32.mrf.mxu0
        %v736 = vadd.f32 %v709, %v735
        %737 = vdwg.mxu0
        %738 = vmatpush.msra.mxu0 0.0
        %739 = vmatpush.msra.mxu0 0.0
        %740 = vmatpush.msra.mxu0 0.0
        %741 = vmatpush.msra.mxu0 0.0
        %742 = vmatpush.msra.mxu0 0.0
        %743 = vmatpush.msra.mxu0 0.0
        %744 = vmatpush.msra.mxu0 0.0
        %745 = vmatpush.msra.mxu0 0.0
        %746 = vmatpush.msra.mxu0 0.0
        %747 = vmatpush.msra.mxu0 0.0
        %748 = vmatpush.msra.mxu0 0.0
        %749 = vmatpush.msra.mxu0 0.0
        %750 = vmatpush.msra.mxu0 0.0
        %751 = vmatpush.msra.mxu0 0.0
        %v752 = vand.u32 %v600, 4294901760
        %753 = vmatpush.msra.mxu0 %v752
        %v754 = vand.u32 %v590, 4294901760
        %755 = vmatpush.msra.mxu0 %v754
        %v756 = vand.u32 %v597, 4294901760
        %757 = vmatmul.f32.gmra.mxu0 %v756
        %v758 = vpop.f32.mrf.mxu0
        %v759 = vadd.f32 %v736, %v758
        %760 = vdwg.mxu0
        %v761 = vtanh.pop %v759
        %v762 = vmul.f32 %v761, 2.0
        %763 = vst [vmem:[%s176] sm:$0x1] %v762
        %s764 = sand.u32 %s75, 1
        %s765 = scalar_lea.sflag [#allocation4], %s764
        %s766 = sand.u32 %s75, 1
        %s767 = scalar_lea.vmem [#allocation7], %s766
        // Predicated region
        $region37: #{tpu_custom_call.1} parent=27 // pred_check
          %p768 = pneg %p85
        $region38: #{tpu_custom_call.1} parent=27 // pred_check_branch
          %770 = sbr.rel (%p768) target = $region40
        $region39: #{tpu_custom_call.1} parent=27 // pred_region
          %772 = vsyncadd %s765, 0
          %s773 = scalar_lea.hbm %s2, %s20
          %s775 = sshll.u32 %s767, 4
          %s776 = int_to_ptr.vmem [resolvable:$true] %s775
          %s777 = sshll.u32 %s773, 4
          %s778 = int_to_ptr.hbm [resolvable:$true] %s777
          %780 = dma.vmem_to_hbm [thread:$0]  %s776, 16, %s778, %s765
        $region40: #{tpu_custom_call.1} parent=27 // pred_fallthru
          _
      $region28: #{tpu_custom_call.1} parent=5 // pred_fallthru
        _
      %p781 = scmp.le.s32.totalorder 2, %s15
      // Predicated region
      $region41: #{tpu_custom_call.1} parent=5 // pred_check
        %p782 = pneg %p781
      $region42: #{tpu_custom_call.1} parent=5 // pred_check_branch
        %784 = sbr.rel (%p782) target = $region44
      $region43: #{tpu_custom_call.1} parent=5 // pred_region
        %s785 = ssub.s32 %s15, 2
        // Predicated region
        $region45: #{tpu_custom_call.1} parent=43 // pred_check
          %p786 = pneg %p91
        $region46: #{tpu_custom_call.1} parent=43 // pred_check_branch
          %788 = sbr.rel (%p786) target = $region48
        $region47: #{tpu_custom_call.1} parent=43 // pred_region
          %s789 = sand.u32 %s76, 1
          %s790 = scalar_lea.sflag [#allocation4], %s789
          %s791 = sand.u32 %s76, 1
          %s792 = scalar_lea.vmem [#allocation7], %s791
          %794 = dma.done %s790, 16
        $region48: #{tpu_custom_call.1} parent=43 // pred_fallthru
          _
      $region44: #{tpu_custom_call.1} parent=5 // pred_fallthru
        _
    $region6: #{tpu_custom_call.1} parent=1 // loop_footer
      %s19 = sadd.s32 1, %s15
    $region7: #{tpu_custom_call.1} parent=1 // loop_footer_branch
      %14 = sbr.rel target = $region3
    $region8: #{tpu_custom_call.1} parent=1 // loop_exit
      _
    %795 = vsyncpa [#allocation3], 1
    %s796 = scalar_lea.sflag [#allocation3], 1
    %797 = vsyncpa %s796, 1
    %798 = vsyncpa [#allocation6], 1
    %799 = vsyncpa [#allocation4], 1
    %s800 = scalar_lea.sflag [#allocation4], 1
    %801 = vsyncpa %s800, 1

</llo_original>
